<compile_context>
chip_gen: v5e
topology: v5e:2x2
jax: 0.10.0
libtpu: 0.0.40
codegen_flags: <defaults>
</compile_context>

<pallas_src>
import numpy as np
import jax
import jax.numpy as jnp
from jax.experimental import pallas as pl
from jax.experimental.pallas import tpu as pltpu


# ----------------------------------------------------------------------------
# Per-generation budgets
# ----------------------------------------------------------------------------
def _budgets():
    """(block_target_bytes, vmem_limit_bytes) tuned per TPU generation."""
    try:
        vmem_cap = pltpu.get_tpu_info().vmem_capacity_bytes
    except Exception:
        vmem_cap = 64 * 1024 * 1024  # be conservative (v7x-sized) if unknown
    if vmem_cap >= 100 * 1024 * 1024:          # v5e / v6e: 128 MiB physical VMEM
        return 6 * 1024 * 1024, 48 * 1024 * 1024
    # v7x: 64 MiB physical / 32 MiB scoped default -> 4 MiB blocks keeps
    # 2x(in)+2x(out) double-buffering at ~16 MiB, well inside the limit.
    return 4 * 1024 * 1024, 32 * 1024 * 1024


def _static_zero_fraction(mask):
    """Fraction of zero mask entries if the mask is concrete, else None."""
    try:
        m = np.asarray(mask)
    except Exception:
        return None
    return float(np.mean(m == 0))


# ----------------------------------------------------------------------------
# Dense path: auto-pipelined lane-dense broadcast multiply
# ----------------------------------------------------------------------------
def _dense_mask_kernel(m_ref, x_ref, o_ref):
    # m_ref: (TM, 1) per-row mask values (already in x.dtype).
    # x_ref/o_ref: (TM, TN) lane-dense tiles.
    o_ref[...] = x_ref[...] * m_ref[...]


def _choose_dense_tiles(rows, cols, itemsize, target_bytes):
    """Pick (TM, TN) with block size <= ~target_bytes, dtype-aware alignment."""
    row_align = 8 * max(1, 4 // itemsize)      # 8 f32, 16 bf16, 32 int8/fp8
    # Lane tile sized so that ONE aligned row-group fits the budget; this is
    # the fix for the old overflow (tn used to eat the whole budget in 1 row).
    max_tn = max(128, (target_bytes // (row_align * itemsize) // 128) * 128)
    tn = cols if cols <= max_tn else max_tn
    tm = target_bytes // max(1, tn * itemsize)
    if tm >= rows:
        tm = rows
    else:
        tm = max(row_align, (tm // row_align) * row_align)
    # If a multi-MiB problem collapsed to a single block, split the row axis so
    # both v7x TensorCores get work and the pipeline has >= 2 steps.
    if (tm == rows and tn == cols and rows >= 2 * row_align
            and rows * cols * itemsize > 2 * 1024 * 1024):
        tm = max(row_align, ((-(-rows // 2)) // row_align) * row_align)
    return tm, tn


def _random_mask_2d_dense(x, mask, *, donate_x=False):
    B, C, H, W = x.shape
    rows, cols = B * C, H * W
    itemsize = jnp.dtype(x.dtype).itemsize
    target_bytes, vmem_limit = _budgets()

    x2 = x.reshape(rows, cols)                                   # lane-dense
    m2 = jnp.tile(mask.astype(x.dtype), B).reshape(rows, 1)      # row r=b*C+c

    tm, tn = _choose_dense_tiles(rows, cols, itemsize, target_bytes)
    grid = (pl.cdiv(rows, tm), pl.cdiv(cols, tn))

    cost = pl.CostEstimate(
        flops=rows * cols,
        transcendentals=0,
        bytes_accessed=2 * rows * cols * itemsize + rows * itemsize,
    )

    out2 = pl.pallas_call(
        _dense_mask_kernel,
        out_shape=jax.ShapeDtypeStruct((rows, cols), x.dtype),
        grid_spec=pltpu.PrefetchScalarGridSpec(
            num_scalar_prefetch=0,
            grid=grid,
            in_specs=[
                pl.BlockSpec((tm, 1), lambda i, j: (i, 0)),   # per-row mask col
                pl.BlockSpec((tm, tn), lambda i, j: (i, j)),  # lane-dense data
            ],
            out_specs=pl.BlockSpec((tm, tn), lambda i, j: (i, j)),
        ),
        compiler_params=pltpu.CompilerParams(
            dimension_semantics=("parallel", "parallel"),
            vmem_limit_bytes=vmem_limit,
        ),
        cost_estimate=cost,
        input_output_aliases={1: 0} if donate_x else {},
    )(m2, x2)
    return out2.reshape(B, C, H, W)


# ----------------------------------------------------------------------------
# Sparse path: skip the input HBM read for dropped channels
# ----------------------------------------------------------------------------
def _choose_sparse_tn(cols, itemsize, target_bytes):
    """Column tile for the sparse path: a multiple-of-128 exact divisor of cols
    no larger than the block budget. Returns None -> use the dense path."""
    if cols % 128 != 0:
        return None
    max_elems = max(128, target_bytes // itemsize)
    if cols <= max_elems:
        return cols
    k = -(-cols // max_elems)                      # ceil div
    for cand in range(k, k + 64):
        if cols % cand == 0 and (cols // cand) % 128 == 0:
            return cols // cand
    return None


def _make_sparse_kernel(tn):
    def kernel(flags_ref, m_ref, x_hbm, o_ref, buf, sem):
        i = pl.program_id(0)            # channel-row index (one (b, c) pair)
        j = pl.program_id(1)            # column block
        keep = flags_ref[i] != 0

        @pl.when(keep)
        def _():
            col0 = pl.multiple_of(j * tn, 128)
            cp = pltpu.make_async_copy(
                x_hbm.at[pl.ds(i, 1), pl.ds(0, 1), pl.ds(col0, tn)],
                buf, sem.at[0])
            cp.start()
            cp.wait()
            o_ref[...] = buf[...] * m_ref[...]

        @pl.when(jnp.logical_not(keep))
        def _():
            # Dropped channel: never touches x in HBM, just writes zeros.
            o_ref[...] = jnp.zeros_like(o_ref)

    return kernel


def _random_mask_2d_sparse(x, mask, tn):
    B, C, H, W = x.shape
    rows, cols = B * C, H * W
    itemsize = jnp.dtype(x.dtype).itemsize
    _, vmem_limit = _budgets()

    x3 = x.reshape(rows, 1, cols)                               # raw HBM view
    m3 = jnp.tile(mask.astype(x.dtype), B).reshape(rows, 1, 1)
    flags = jnp.tile((mask != 0).astype(jnp.int32), B)          # (rows,) SMEM

    grid = (rows, cols // tn)

    cost = pl.CostEstimate(
        flops=rows * cols,
        transcendentals=0,
        bytes_accessed=2 * rows * cols * itemsize,              # upper bound
    )

    out3 = pl.pallas_call(
        _make_sparse_kernel(tn),
        out_shape=jax.ShapeDtypeStruct((rows, 1, cols), x.dtype),
        grid_spec=pltpu.PrefetchScalarGridSpec(
            num_scalar_prefetch=1,
            grid=grid,
            in_specs=[
                pl.BlockSpec((1, 1, 1), lambda i, j, _flags: (i, 0, 0)),
                pl.BlockSpec(memory_space=pl.ANY),   # x stays in HBM
            ],
            out_specs=pl.BlockSpec((1, 1, tn), lambda i, j, _flags: (i, 0, j)),
            scratch_shapes=[
                pltpu.VMEM((1, 1, tn), x.dtype),
                pltpu.SemaphoreType.DMA((1,)),
            ],
        ),
        compiler_params=pltpu.CompilerParams(
            dimension_semantics=("parallel", "arbitrary"),
            vmem_limit_bytes=vmem_limit,
        ),
        cost_estimate=cost,
    )(flags, m3, x3)
    return out3.reshape(B, C, H, W)


# ----------------------------------------------------------------------------
# Public wrapper (RandomMask2d.forward)
# ----------------------------------------------------------------------------
def random_mask_2d(x, mask, *, mode="auto", donate_x=False):
    """out[b, c, h, w] = mask[c] * x[b, c, h, w] (fixed per-channel mask).

    mode: "auto" | "dense" | "sparse" | "xla".
    """
    B, C, H, W = x.shape
    assert mask.shape == (C,), f"mask must have shape ({C},), got {mask.shape}"
    rows, cols = B * C, H * W
    itemsize = jnp.dtype(x.dtype).itemsize
    target_bytes, _ = _budgets()

    if mode == "xla" or (mode == "auto" and rows * cols * itemsize <= (1 << 20)):
        # Tiny input: fixed kernel-launch + grid-step overhead dominates; a
        # fused XLA broadcast-multiply is strictly faster.
        return mask.astype(x.dtype).reshape(1, C, 1, 1) * x

    if mode in ("auto", "sparse"):
        tn = _choose_sparse_tn(cols, itemsize, target_bytes)
        use_sparse = tn is not None
        if mode == "auto":
            # Only worth it when each channel row is big enough that the
            # skipped reads outweigh the exposed (non-pipelined) DMAs of kept
            # channels, and the mask actually drops a decent fraction.
            zero_frac = _static_zero_fraction(mask)
            use_sparse = (use_sparse and cols * itemsize >= (1 << 20)
                          and zero_frac is not None and zero_frac >= 0.25)
        if use_sparse:
            return _random_mask_2d_sparse(x, mask, tn)

    return _random_mask_2d_dense(x, mask, donate_x=donate_x)


def create_mask(in_channels, droprate=0.9, seed=0):
    """Deterministic replica of RandomMask2d.create_mask, flattened to (C,)."""
    num_dropped = int(in_channels * droprate)
    rng = np.random.default_rng(seed)
    dropped_idx = rng.choice(in_channels, num_dropped, replace=False)
    mask = np.ones((in_channels,), dtype=np.float32)
    mask[dropped_idx] = 0.0
    return jnp.asarray(mask)


if __name__ == "__main__":
    key = jax.random.PRNGKey(0)
    k1, k2 = jax.random.split(key)

    # --- Test 1: dense auto-pipelined path (module-sized small input) -------
    B, C, H, W = 2, 4, 16, 16
    x = jax.random.normal(k1, (B, C, H, W), dtype=jnp.float32)
    mask = create_mask(C, droprate=0.9, seed=0)
    out = jax.block_until_ready(random_mask_2d(x, mask, mode="dense"))
    ref = mask.reshape(1, C, 1, 1) * x
    np.testing.assert_allclose(np.asarray(out), np.asarray(ref), rtol=0, atol=0)

    # --- Test 2: sparse DMA-skip path (exercised at a small qualifying shape)
    B2, C2, H2, W2 = 2, 8, 32, 32
    x2 = jax.random.normal(k2, (B2, C2, H2, W2), dtype=jnp.float32)
    mask2 = create_mask(C2, droprate=0.9, seed=1)
    out2 = jax.block_until_ready(random_mask_2d(x2, mask2, mode="sparse"))
    ref2 = mask2.reshape(1, C2, 1, 1) * x2
    np.testing.assert_allclose(np.asarray(out2), np.asarray(ref2), rtol=0, atol=0)

    print("KERNEL_OK")
</pallas_src>

<mosaic_0001>
module attributes {stable_mosaic.version = 11 : i64} {
  func.func @_dense_mask_kernel(%arg0: i32, %arg1: i32, %arg2: memref<8x1xf32, #tpu.memory_space<vmem>>, %arg3: memref<8x256xf32, #tpu.memory_space<vmem>>, %arg4: memref<8x256xf32, #tpu.memory_space<vmem>>) attributes {dimension_semantics = [#tpu.dimension_semantics<parallel>, #tpu.dimension_semantics<parallel>], iteration_bounds = array<i64: 1, 1>, scalar_prefetch = 0 : i64, scratch_operands = 0 : i64, tpu.core_type = #tpu.core_type<tc>, window_params = [{transform_indices = @transform_0, window_bounds = array<i64: 8, 1>}, {transform_indices = @transform_1, window_bounds = array<i64: 8, 256>}, {transform_indices = @transform_2, window_bounds = array<i64: 8, 256>}]} {
    %c0 = arith.constant 0 : index
    %c0_0 = arith.constant 0 : index
    %0 = vector.load %arg3[%c0, %c0_0] : memref<8x256xf32, #tpu.memory_space<vmem>>, vector<8x256xf32>
    %c0_1 = arith.constant 0 : index
    %c0_2 = arith.constant 0 : index
    %1 = vector.load %arg2[%c0_1, %c0_2] : memref<8x1xf32, #tpu.memory_space<vmem>>, vector<8x1xf32>
    %2 = vector.broadcast %1 : vector<8x1xf32> to vector<8x256xf32>
    %3 = arith.mulf %0, %2 : vector<8x256xf32>
    %c0_3 = arith.constant 0 : index
    %c0_4 = arith.constant 0 : index
    %4 = vector.load %arg4[%c0_3, %c0_4] : memref<8x256xf32, #tpu.memory_space<vmem>>, vector<8x256xf32>
    tpu.vector_store %arg4[%c0_3, %c0_4], %3 {strides = array<i32>} : memref<8x256xf32, #tpu.memory_space<vmem>>, vector<8x256xf32>,
    return
  }
  func.func @transform_0(%arg0: i32, %arg1: i32) -> (i32, i32) {
    %c0_i32 = arith.constant 0 : i32
    %c0_i32_0 = arith.constant 0 : i32
    return %arg0, %c0_i32 : i32, i32
  }
  func.func @transform_1(%arg0: i32, %arg1: i32) -> (i32, i32) {
    %c0_i32 = arith.constant 0 : i32
    return %arg0, %arg1 : i32, i32
  }
  func.func @transform_2(%arg0: i32, %arg1: i32) -> (i32, i32) {
    %c0_i32 = arith.constant 0 : i32
    return %arg0, %arg1 : i32, i32
  }
}

</mosaic_0001>

<llo_original>
// kernel: tpu_custom_call.1
$region0: #{tpu_custom_call.1}
  #allocation0 [shape = 'u32[]', space=smem, size = 0x4, offset = 0x4, fixed_abs, tag = 'smem constant byte address 0x4 - core index']
  #allocation1 [shape = 'u32[72,128]{1,0:T(1,128)}', space=vmem, size = 0x9000, scoped, tag = 'internal scratch']
  %s0 = inlined_call_operand.vmem [shape: f32[8,1], index: 0, kind: input, shape index: {}]
  %s1 = inlined_call_operand.hbm [shape: f32[8,256], index: 1, kind: input, shape index: {}]
  %s2 = inlined_call_operand.hbm [shape: f32[8,256], index: 2, kind: output, shape index: {}]
  %s3 = sld [smem:[#allocation0]]
  $region22: #{tpu_custom_call.1} parent=0
    _
  %s5 = ssub.s32 1, %s3
  %s6 = scalar_select 0, %s5, %s3
  $region1: #{tpu_custom_call.1} parent=0
    #allocation2 [shape = 'u8[8192]{0}', space=vmem, size = 0x2000, scoped, tag = 'input window, operand 1, single buffered']
    #allocation3 [shape = 's32[1]{0}', space=sflag, size = 0x4, scoped, tag = 'scoped memory for tpu_custom_call.1']
    #allocation4 [shape = 's32[1]{0}', space=sflag, size = 0x4, scoped, tag = 'scoped memory for tpu_custom_call.1']
    #allocation5 [shape = 'u8[8192]{0}', space=vmem, size = 0x2000, scoped, tag = 'output window, operand 0, single buffered']
    %7 = vsyncpa [#allocation3], 0
    %8 = vsyncpa [#allocation4], 0
    // Predicated region
    $region2: #{tpu_custom_call.1} parent=1 // pred_check
      _
    $region3: #{tpu_custom_call.1} parent=1 // pred_check_branch
      %10 = sbr.rel (0) target = $region5
    $region4: #{tpu_custom_call.1} parent=1 // pred_region
      _
    $region5: #{tpu_custom_call.1} parent=1 // pred_fallthru
      _
    // Predicated region
    $region6: #{tpu_custom_call.1} parent=1 // pred_check
      _
    $region7: #{tpu_custom_call.1} parent=1 // pred_check_branch
      %12 = sbr.rel (0) target = $region9
    $region8: #{tpu_custom_call.1} parent=1 // pred_region
      %14 = vsyncadd [#allocation3], 0
      %s16 = sshll.u32 %s1, 4
      %s17 = int_to_ptr.hbm [resolvable:$true] %s16
      %s18 = sshll.u32 [#allocation2], 4
      %s19 = int_to_ptr.vmem [resolvable:$true] %s18
      %21 = dma.hbm_to_vmem [thread:$0]  %s17, 256, %s19, [#allocation3]
    $region9: #{tpu_custom_call.1} parent=1 // pred_fallthru
      _
    // Predicated region
    $region10: #{tpu_custom_call.1} parent=1 // pred_check
      _
    $region11: #{tpu_custom_call.1} parent=1 // pred_check_branch
      %23 = sbr.rel (0) target = $region13
    $region12: #{tpu_custom_call.1} parent=1 // pred_region
      %25 = dma.done [#allocation3], 256
    $region13: #{tpu_custom_call.1} parent=1 // pred_fallthru
      _
    %v26 = vld [vmem:[#allocation2] sm:$0xff]
    %v27 = vld [vmem:[#allocation2 + $0x8] sm:$0xff]
    %v28 = vld [vmem:[%s0] sm:$0xff]
    %30 = vset.pattern.permute.xlu0 0
    %31 = vperm.xlu0 %30, %v28
    %v32 = vpop.permute.xlu0 %31
    %v34 = vmul.f32 %v26, %v32
    %v35 = vmul.f32 %v27, %v32
    %36 = vst [vmem:[#allocation5] sm:$0xff] %v34
    %37 = vst [vmem:[#allocation5 + $0x8] sm:$0xff] %v35
    // Predicated region
    $region14: #{tpu_custom_call.1} parent=1 // pred_check
      _
    $region15: #{tpu_custom_call.1} parent=1 // pred_check_branch
      %39 = sbr.rel (0) target = $region17
    $region16: #{tpu_custom_call.1} parent=1 // pred_region
      %41 = vsyncadd [#allocation4], 0
      %s43 = sshll.u32 [#allocation5], 4
      %s44 = int_to_ptr.vmem [resolvable:$true] %s43
      %s45 = sshll.u32 %s2, 4
      %s46 = int_to_ptr.hbm [resolvable:$true] %s45
      %48 = dma.vmem_to_hbm [thread:$0]  %s44, 256, %s46, [#allocation4]
    $region17: #{tpu_custom_call.1} parent=1 // pred_fallthru
      _
    // Predicated region
    $region18: #{tpu_custom_call.1} parent=1 // pred_check
      _
    $region19: #{tpu_custom_call.1} parent=1 // pred_check_branch
      %50 = sbr.rel (0) target = $region21
    $region20: #{tpu_custom_call.1} parent=1 // pred_region
      %52 = dma.done [#allocation4], 256
    $region21: #{tpu_custom_call.1} parent=1 // pred_fallthru
      _
    %53 = vsyncpa [#allocation3], 1
    %54 = vsyncpa [#allocation4], 1

</llo_original>
